<compile_context>
chip_gen: v5e
topology: v5e:2x2
jax: 0.10.0
libtpu: 0.0.40
codegen_flags: <defaults>
</compile_context>

<pallas_src>
import functools

import jax
import jax.numpy as jnp
from jax.experimental import pallas as pl
from jax.experimental.pallas import tpu as pltpu


H = 128          # padded lane width for all activations / weight columns
NEG = -1.0e30    # bias fill for the padded logit lanes (keeps log_softmax exact)

# Static row offsets of each fused weight block inside the packed weight slab.
_W_OFF_CONV1 = 0
_W_OFF_CONV2 = 2 * H
_W_OFF_CONV3 = 4 * H
_W_OFF_LIN1 = 6 * H
_W_OFF_LIN2 = 7 * H
_W_OFF_LIN3 = 8 * H
_W_ROWS = 9 * H  # 1152


# ----------------------------------------------------------------------------
# Pallas kernel: full forward pass for a small graph resident in VMEM.
# ----------------------------------------------------------------------------
def gnn_kernel(x_ref, a_ref, w_ref, b_ref, out_ref):
    x = x_ref[...]                  # [N, 128]  (real features in lanes 0..8)
    a = a_ref[...]                  # [N, N]    mean-aggregation matrix

    def mm(lhs, rhs):
        return jnp.dot(lhs, rhs, preferred_element_type=jnp.float32)

    def sage(h, w_off, b_row):
        # Fused SAGE layer: one K=256 matmul instead of two K<=128 matmuls.
        h_cat = jnp.concatenate([mm(a, h), h], axis=-1)          # [N, 256]
        return mm(h_cat, w_ref[w_off:w_off + 2 * H, :]) + b_ref[b_row:b_row + 1, :]

    def dense(h, w_off, b_row):
        return mm(h, w_ref[w_off:w_off + H, :]) + b_ref[b_row:b_row + 1, :]

    # conv1 (normalize=True) -> act1 (ReLU; Dropout is identity in eval mode)
    h = sage(x, _W_OFF_CONV1, 0)                                  # [N, 128]
    ss = jnp.sum(h * h, axis=-1, keepdims=True)
    h = h * jax.lax.rsqrt(jnp.maximum(ss, 1e-24))                 # F.normalize(p=2, dim=-1)
    h = jnp.maximum(h, 0.0)
    # TODO(synk): nn.Dropout(p=0.75) omitted (identity at inference).

    # conv2 -> act2
    h = jnp.maximum(sage(h, _W_OFF_CONV2, 1), 0.0)

    # conv3
    h = sage(h, _W_OFF_CONV3, 2)

    # MLP head
    h = jnp.maximum(dense(h, _W_OFF_LIN1, 3), 0.0)
    h = jnp.maximum(dense(h, _W_OFF_LIN2, 4), 0.0)
    z = dense(h, _W_OFF_LIN3, 5)          # [N, 128]; lanes 3..127 carry bias -1e30

    # log_softmax along last dim (padded lanes contribute exp(-1e30 - m) == 0)
    m = jnp.max(z, axis=-1, keepdims=True)
    lse = jnp.log(jnp.sum(jnp.exp(z - m), axis=-1, keepdims=True)) + m
    out_ref[...] = z - lse


def gnn_forward(x_pad, a_mean, w_slab, b_slab):
    n = x_pad.shape[0]
    out = pl.pallas_call(
        gnn_kernel,
        out_shape=jax.ShapeDtypeStruct((n, H), jnp.float32),
        in_specs=[pl.BlockSpec(memory_space=pltpu.MemorySpace.VMEM)] * 4,
        out_specs=pl.BlockSpec(memory_space=pltpu.MemorySpace.VMEM),
    )(x_pad, a_mean, w_slab, b_slab)
    return out[:, :3]


# ----------------------------------------------------------------------------
# Glue: deterministic parameter init, packing, dense mean-aggregation matrix.
# ----------------------------------------------------------------------------
def init_params(key):
    """Weights stored as [in, out] so the kernel does x @ W + b."""
    def linear(k, fan_in, fan_out, bias=True):
        kw, kb = jax.random.split(k)
        bound = 1.0 / jnp.sqrt(float(fan_in))
        w = jax.random.uniform(kw, (fan_in, fan_out), jnp.float32, -bound, bound)
        if not bias:
            return (w,)
        b = jax.random.uniform(kb, (1, fan_out), jnp.float32, -bound, bound)
        return (w, b)

    ks = jax.random.split(key, 9)
    # SAGEConv: lin_l (with bias) acts on aggregated neighbors, lin_r (no bias) on root.
    w1l, b1l = linear(ks[0], 9, 64)
    (w1r,) = linear(ks[1], 9, 64, bias=False)
    w2l, b2l = linear(ks[2], 64, 64)
    (w2r,) = linear(ks[3], 64, 64, bias=False)
    w3l, b3l = linear(ks[4], 64, 64)
    (w3r,) = linear(ks[5], 64, 64, bias=False)
    wl1, bl1 = linear(ks[6], 64, 64)
    wl2, bl2 = linear(ks[7], 64, 64)
    wl3, bl3 = linear(ks[8], 64, 3)
    return (w1l, b1l, w1r, w2l, b2l, w2r, w3l, b3l, w3r,
            wl1, bl1, wl2, bl2, wl3, bl3)


def pack_params(params):
    """Pack all weights into one [1152,128] slab and all biases into one [8,128] slab."""
    (w1l, b1l, w1r, w2l, b2l, w2r, w3l, b3l, w3r,
     wl1, bl1, wl2, bl2, wl3, bl3) = params

    def conv_block(wl, wr):
        blk = jnp.zeros((2 * H, H), jnp.float32)
        blk = blk.at[:wl.shape[0], :wl.shape[1]].set(wl)           # rows 0..K-1: lin_l
        blk = blk.at[H:H + wr.shape[0], :wr.shape[1]].set(wr)      # rows 128..: lin_r
        return blk

    def lin_block(w):
        blk = jnp.zeros((H, H), jnp.float32)
        return blk.at[:w.shape[0], :w.shape[1]].set(w)

    w_slab = jnp.concatenate(
        [conv_block(w1l, w1r), conv_block(w2l, w2r), conv_block(w3l, w3r),
         lin_block(wl1), lin_block(wl2), lin_block(wl3)], axis=0)
    assert w_slab.shape == (_W_ROWS, H)

    def pad_bias(b, fill=0.0):
        row = jnp.full((H,), fill, jnp.float32)
        return row.at[:b.shape[-1]].set(b.reshape(-1))

    b_slab = jnp.stack(
        [pad_bias(b1l), pad_bias(b2l), pad_bias(b3l),
         pad_bias(bl1), pad_bias(bl2), pad_bias(bl3, fill=NEG),
         jnp.zeros((H,), jnp.float32), jnp.zeros((H,), jnp.float32)], axis=0)
    return w_slab, b_slab


def mean_aggregation_matrix(edge_index, num_nodes):
    src, dst = edge_index[0], edge_index[1]
    a = jnp.zeros((num_nodes, num_nodes), jnp.float32).at[dst, src].add(1.0)
    deg = jnp.sum(a, axis=1, keepdims=True)
    return a / jnp.maximum(deg, 1.0)   # nodes with no in-edges aggregate to 0


def reference_forward(x, a, params):
    """Pure-JAX reference (same math, HIGHEST precision) for verification."""
    (w1l, b1l, w1r, w2l, b2l, w2r, w3l, b3l, w3r,
     wl1, bl1, wl2, bl2, wl3, bl3) = params
    mm = functools.partial(jnp.dot, precision=jax.lax.Precision.HIGHEST)

    def sage(h, wl, bl, wr):
        return mm(mm(a, h), wl) + bl + mm(h, wr)

    h = sage(x, w1l, b1l, w1r)
    h = h / jnp.maximum(jnp.linalg.norm(h, axis=-1, keepdims=True), 1e-12)
    h = jax.nn.relu(h)
    h = jax.nn.relu(sage(h, w2l, b2l, w2r))
    h = sage(h, w3l, b3l, w3r)
    z = jax.nn.relu(mm(h, wl1) + bl1)
    z = jax.nn.relu(mm(z, wl2) + bl2)
    z = mm(z, wl3) + bl3
    return jax.nn.log_softmax(z, axis=-1)


if __name__ == "__main__":
    key = jax.random.PRNGKey(0)
    k_feat, k_edge, k_param = jax.random.split(key, 3)

    N, F_IN, E = 32, 9, 96
    x = jax.random.normal(k_feat, (N, F_IN), jnp.float32)          # data.new_x
    edge_index = jax.random.randint(k_edge, (2, E), 0, N)           # data.new_edge_index
    a_mean = mean_aggregation_matrix(edge_index, N)

    params = init_params(k_param)
    w_slab, b_slab = pack_params(params)

    # Lane-pad the node features once in the wrapper (zeros beyond feature 9).
    x_pad = jnp.zeros((N, H), jnp.float32).at[:, :F_IN].set(x)

    out = gnn_forward(x_pad, a_mean, w_slab, b_slab)
    out = jax.block_until_ready(out)

    ref = reference_forward(x, a_mean, params)
    assert out.shape == (N, 3)
    assert jnp.allclose(out, ref, rtol=1e-3, atol=1e-3), "mismatch vs JAX reference"

    print("KERNEL_OK")
</pallas_src>

<mosaic_0001>
module attributes {stable_mosaic.version = 11 : i64} {
  func.func @gnn_kernel(%arg0: memref<32x128xf32, #tpu.memory_space<vmem>>, %arg1: memref<32x32xf32, #tpu.memory_space<vmem>>, %arg2: memref<1152x128xf32, #tpu.memory_space<vmem>>, %arg3: memref<8x128xf32, #tpu.memory_space<vmem>>, %arg4: memref<32x128xf32, #tpu.memory_space<vmem>>) attributes {dimension_semantics = [], scalar_prefetch = 0 : i64, scratch_operands = 0 : i64, tpu.core_type = #tpu.core_type<tc>} {
    %c0 = arith.constant 0 : index
    %c0_0 = arith.constant 0 : index
    %0 = vector.load %arg0[%c0, %c0_0] : memref<32x128xf32, #tpu.memory_space<vmem>>, vector<32x128xf32>
    %c0_1 = arith.constant 0 : index
    %c0_2 = arith.constant 0 : index
    %1 = vector.load %arg1[%c0_1, %c0_2] : memref<32x32xf32, #tpu.memory_space<vmem>>, vector<32x32xf32>
    %cst = arith.constant dense<0.000000e+00> : vector<32x128xf32>
    %2 = tpu.matmul %1, %0, %cst {dimension_numbers = #tpu.dot_dimension_numbers<[1], [0], [0], [1], [0, 0, 1, 1], [], []>} : vector<32x32xf32>, vector<32x128xf32>, vector<32x128xf32> -> vector<32x128xf32>
    %3 = tpu.concatenate %2, %0 in 1 : vector<32x128xf32>, vector<32x128xf32> -> vector<32x256xf32>
    %c0_3 = arith.constant 0 : index
    %c0_4 = arith.constant 0 : index
    %4 = vector.load %arg2[%c0_3, %c0_4] : memref<1152x128xf32, #tpu.memory_space<vmem>>, vector<256x128xf32>
    %cst_5 = arith.constant dense<0.000000e+00> : vector<32x128xf32>
    %5 = tpu.matmul %3, %4, %cst_5 {dimension_numbers = #tpu.dot_dimension_numbers<[1], [0], [0], [1], [0, 0, 1, 1], [], []>} : vector<32x256xf32>, vector<256x128xf32>, vector<32x128xf32> -> vector<32x128xf32>
    %c0_6 = arith.constant 0 : index
    %c0_7 = arith.constant 0 : index
    %6 = vector.load %arg3[%c0_6, %c0_7] : memref<8x128xf32, #tpu.memory_space<vmem>>, vector<1x128xf32>
    %7 = vector.broadcast %6 : vector<1x128xf32> to vector<32x128xf32>
    %8 = arith.addf %5, %7 : vector<32x128xf32>
    %9 = arith.mulf %8, %8 : vector<32x128xf32>
    %cst_8 = arith.constant dense<0.000000e+00> : vector<32xf32>
    %10 = vector.multi_reduction <add>, %9, %cst_8 [1] : vector<32x128xf32> to vector<32xf32>
    %11 = vector.shape_cast %10 : vector<32xf32> to vector<32x1xf32>
    %cst_9 = arith.constant 1.000000e-24 : f32
    %12 = vector.broadcast %cst_9 : f32 to vector<32x1xf32>
    %13 = arith.maximumf %11, %12 : vector<32x1xf32>
    %14 = math.rsqrt %13 : vector<32x1xf32>
    %15 = vector.broadcast %14 : vector<32x1xf32> to vector<32x128xf32>
    %16 = arith.mulf %8, %15 : vector<32x128xf32>
    %cst_10 = arith.constant 0.000000e+00 : f32
    %17 = vector.broadcast %cst_10 : f32 to vector<32x128xf32>
    %18 = arith.maximumf %16, %17 : vector<32x128xf32>
    %cst_11 = arith.constant dense<0.000000e+00> : vector<32x128xf32>
    %19 = tpu.matmul %1, %18, %cst_11 {dimension_numbers = #tpu.dot_dimension_numbers<[1], [0], [0], [1], [0, 0, 1, 1], [], []>} : vector<32x32xf32>, vector<32x128xf32>, vector<32x128xf32> -> vector<32x128xf32>
    %20 = tpu.concatenate %19, %18 in 1 : vector<32x128xf32>, vector<32x128xf32> -> vector<32x256xf32>
    %c256 = arith.constant 256 : index
    %c0_12 = arith.constant 0 : index
    %21 = vector.load %arg2[%c256, %c0_12] : memref<1152x128xf32, #tpu.memory_space<vmem>>, vector<256x128xf32>
    %cst_13 = arith.constant dense<0.000000e+00> : vector<32x128xf32>
    %22 = tpu.matmul %20, %21, %cst_13 {dimension_numbers = #tpu.dot_dimension_numbers<[1], [0], [0], [1], [0, 0, 1, 1], [], []>} : vector<32x256xf32>, vector<256x128xf32>, vector<32x128xf32> -> vector<32x128xf32>
    %c1 = arith.constant 1 : index
    %c0_14 = arith.constant 0 : index
    %23 = vector.load %arg3[%c1, %c0_14] : memref<8x128xf32, #tpu.memory_space<vmem>>, vector<1x128xf32>
    %24 = vector.broadcast %23 : vector<1x128xf32> to vector<32x128xf32>
    %25 = arith.addf %22, %24 : vector<32x128xf32>
    %cst_15 = arith.constant 0.000000e+00 : f32
    %26 = vector.broadcast %cst_15 : f32 to vector<32x128xf32>
    %27 = arith.maximumf %25, %26 : vector<32x128xf32>
    %cst_16 = arith.constant dense<0.000000e+00> : vector<32x128xf32>
    %28 = tpu.matmul %1, %27, %cst_16 {dimension_numbers = #tpu.dot_dimension_numbers<[1], [0], [0], [1], [0, 0, 1, 1], [], []>} : vector<32x32xf32>, vector<32x128xf32>, vector<32x128xf32> -> vector<32x128xf32>
    %29 = tpu.concatenate %28, %27 in 1 : vector<32x128xf32>, vector<32x128xf32> -> vector<32x256xf32>
    %c512 = arith.constant 512 : index
    %c0_17 = arith.constant 0 : index
    %30 = vector.load %arg2[%c512, %c0_17] : memref<1152x128xf32, #tpu.memory_space<vmem>>, vector<256x128xf32>
    %cst_18 = arith.constant dense<0.000000e+00> : vector<32x128xf32>
    %31 = tpu.matmul %29, %30, %cst_18 {dimension_numbers = #tpu.dot_dimension_numbers<[1], [0], [0], [1], [0, 0, 1, 1], [], []>} : vector<32x256xf32>, vector<256x128xf32>, vector<32x128xf32> -> vector<32x128xf32>
    %c2 = arith.constant 2 : index
    %c0_19 = arith.constant 0 : index
    %32 = vector.load %arg3[%c2, %c0_19] : memref<8x128xf32, #tpu.memory_space<vmem>>, vector<1x128xf32>
    %33 = vector.broadcast %32 : vector<1x128xf32> to vector<32x128xf32>
    %34 = arith.addf %31, %33 : vector<32x128xf32>
    %c768 = arith.constant 768 : index
    %c0_20 = arith.constant 0 : index
    %35 = vector.load %arg2[%c768, %c0_20] : memref<1152x128xf32, #tpu.memory_space<vmem>>, vector<128x128xf32>
    %cst_21 = arith.constant dense<0.000000e+00> : vector<32x128xf32>
    %36 = tpu.matmul %34, %35, %cst_21 {dimension_numbers = #tpu.dot_dimension_numbers<[1], [0], [0], [1], [0, 0, 1, 1], [], []>} : vector<32x128xf32>, vector<128x128xf32>, vector<32x128xf32> -> vector<32x128xf32>
    %c3 = arith.constant 3 : index
    %c0_22 = arith.constant 0 : index
    %37 = vector.load %arg3[%c3, %c0_22] : memref<8x128xf32, #tpu.memory_space<vmem>>, vector<1x128xf32>
    %38 = vector.broadcast %37 : vector<1x128xf32> to vector<32x128xf32>
    %39 = arith.addf %36, %38 : vector<32x128xf32>
    %cst_23 = arith.constant 0.000000e+00 : f32
    %40 = vector.broadcast %cst_23 : f32 to vector<32x128xf32>
    %41 = arith.maximumf %39, %40 : vector<32x128xf32>
    %c896 = arith.constant 896 : index
    %c0_24 = arith.constant 0 : index
    %42 = vector.load %arg2[%c896, %c0_24] : memref<1152x128xf32, #tpu.memory_space<vmem>>, vector<128x128xf32>
    %cst_25 = arith.constant dense<0.000000e+00> : vector<32x128xf32>
    %43 = tpu.matmul %41, %42, %cst_25 {dimension_numbers = #tpu.dot_dimension_numbers<[1], [0], [0], [1], [0, 0, 1, 1], [], []>} : vector<32x128xf32>, vector<128x128xf32>, vector<32x128xf32> -> vector<32x128xf32>
    %c4 = arith.constant 4 : index
    %c0_26 = arith.constant 0 : index
    %44 = vector.load %arg3[%c4, %c0_26] : memref<8x128xf32, #tpu.memory_space<vmem>>, vector<1x128xf32>
    %45 = vector.broadcast %44 : vector<1x128xf32> to vector<32x128xf32>
    %46 = arith.addf %43, %45 : vector<32x128xf32>
    %cst_27 = arith.constant 0.000000e+00 : f32
    %47 = vector.broadcast %cst_27 : f32 to vector<32x128xf32>
    %48 = arith.maximumf %46, %47 : vector<32x128xf32>
    %c1024 = arith.constant 1024 : index
    %c0_28 = arith.constant 0 : index
    %49 = vector.load %arg2[%c1024, %c0_28] : memref<1152x128xf32, #tpu.memory_space<vmem>>, vector<128x128xf32>
    %cst_29 = arith.constant dense<0.000000e+00> : vector<32x128xf32>
    %50 = tpu.matmul %48, %49, %cst_29 {dimension_numbers = #tpu.dot_dimension_numbers<[1], [0], [0], [1], [0, 0, 1, 1], [], []>} : vector<32x128xf32>, vector<128x128xf32>, vector<32x128xf32> -> vector<32x128xf32>
    %c5 = arith.constant 5 : index
    %c0_30 = arith.constant 0 : index
    %51 = vector.load %arg3[%c5, %c0_30] : memref<8x128xf32, #tpu.memory_space<vmem>>, vector<1x128xf32>
    %52 = vector.broadcast %51 : vector<1x128xf32> to vector<32x128xf32>
    %53 = arith.addf %50, %52 : vector<32x128xf32>
    %cst_31 = arith.constant dense<0xFF800000> : vector<32xf32>
    %54 = vector.multi_reduction <maximumf>, %53, %cst_31 [1] : vector<32x128xf32> to vector<32xf32>
    %55 = vector.shape_cast %54 : vector<32xf32> to vector<32x1xf32>
    %56 = vector.broadcast %55 : vector<32x1xf32> to vector<32x128xf32>
    %57 = arith.subf %53, %56 : vector<32x128xf32>
    %58 = math.exp %57 : vector<32x128xf32>
    %cst_32 = arith.constant dense<0.000000e+00> : vector<32xf32>
    %59 = vector.multi_reduction <add>, %58, %cst_32 [1] : vector<32x128xf32> to vector<32xf32>
    %60 = vector.shape_cast %59 : vector<32xf32> to vector<32x1xf32>
    %61 = math.log %60 : vector<32x1xf32>
    %62 = arith.addf %61, %55 : vector<32x1xf32>
    %63 = vector.broadcast %62 : vector<32x1xf32> to vector<32x128xf32>
    %64 = arith.subf %53, %63 : vector<32x128xf32>
    %c0_33 = arith.constant 0 : index
    %c0_34 = arith.constant 0 : index
    %65 = vector.load %arg4[%c0_33, %c0_34] : memref<32x128xf32, #tpu.memory_space<vmem>>, vector<32x128xf32>
    tpu.vector_store %arg4[%c0_33, %c0_34], %64 {strides = array<i32>} : memref<32x128xf32, #tpu.memory_space<vmem>>, vector<32x128xf32>,
    return
  }
}

</mosaic_0001>

<llo_original>
// kernel: tpu_custom_call.1
$region0: #{tpu_custom_call.1}
  #allocation0 [shape = 'u32[]', space=smem, size = 0x4, offset = 0x4, fixed_abs, tag = 'smem constant byte address 0x4 - core index']
  #allocation1 [shape = 'u32[72,128]{1,0:T(1,128)}', space=vmem, size = 0x9000, scoped, tag = 'internal scratch']
  %s0 = inlined_call_operand.hbm [shape: f32[32,128], index: 0, kind: input, shape index: {}]
  %s1 = inlined_call_operand.hbm [shape: f32[32,32], index: 1, kind: input, shape index: {}]
  %s2 = inlined_call_operand.hbm [shape: f32[1152,128], index: 2, kind: input, shape index: {}]
  %s3 = inlined_call_operand.hbm [shape: f32[8,128], index: 3, kind: input, shape index: {}]
  %s4 = inlined_call_operand.hbm [shape: f32[32,128], index: 4, kind: output, shape index: {}]
  %s5 = sld [smem:[#allocation0]]
  $region42: #{tpu_custom_call.1} parent=0
    _
  %s7 = ssub.s32 1, %s5
  %s8 = scalar_select 0, %s7, %s5
  $region1: #{tpu_custom_call.1} parent=0
    #allocation2 [shape = 'u8[16384]{0}', space=vmem, size = 0x4000, scoped, tag = 'input window, operand 0, single buffered']
    #allocation3 [shape = 's32[1]{0}', space=sflag, size = 0x4, scoped, tag = 'scoped memory for tpu_custom_call.1']
    #allocation4 [shape = 's32[1]{0}', space=sflag, size = 0x4, scoped, tag = 'scoped memory for tpu_custom_call.1']
    #allocation5 [shape = 'u8[16384]{0}', space=vmem, size = 0x4000, scoped, tag = 'input window, operand 1, single buffered']
    #allocation6 [shape = 's32[1]{0}', space=sflag, size = 0x4, scoped, tag = 'scoped memory for tpu_custom_call.1']
    #allocation7 [shape = 'u8[589824]{0}', space=vmem, size = 0x90000, scoped, tag = 'input window, operand 2, single buffered']
    #allocation8 [shape = 'u8[4096]{0}', space=vmem, size = 0x1000, scoped, tag = 'input window, operand 3, single buffered']
    #allocation9 [shape = 's32[1]{0}', space=sflag, size = 0x4, scoped, tag = 'scoped memory for tpu_custom_call.1']
    #allocation10 [shape = 'u8[16384]{0}', space=vmem, size = 0x4000, scoped, tag = 'output window, operand 0, single buffered']
    %9 = vsyncpa [#allocation3], 0
    %10 = vsyncpa [#allocation6], 0
    %11 = vsyncpa [#allocation9], 0
    %12 = vsyncpa [#allocation4], 0
    // Predicated region
    $region2: #{tpu_custom_call.1} parent=1 // pred_check
      _
    $region3: #{tpu_custom_call.1} parent=1 // pred_check_branch
      %14 = sbr.rel (0) target = $region5
    $region4: #{tpu_custom_call.1} parent=1 // pred_region
      %16 = vsyncadd [#allocation3], 0
      %s17 = sshll.u32 %s0, 4
      %s18 = int_to_ptr.hbm [resolvable:$true] %s17
      %s19 = sshll.u32 [#allocation2], 4
      %s20 = int_to_ptr.vmem [resolvable:$true] %s19
      %25 = dma.hbm_to_vmem [thread:$0]  %s18, 512, %s20, [#allocation3], 128, 128, 8
    $region5: #{tpu_custom_call.1} parent=1 // pred_fallthru
      _
    // Predicated region
    $region6: #{tpu_custom_call.1} parent=1 // pred_check
      _
    $region7: #{tpu_custom_call.1} parent=1 // pred_check_branch
      %27 = sbr.rel (0) target = $region9
    $region8: #{tpu_custom_call.1} parent=1 // pred_region
      %29 = vsyncadd [#allocation6], 0
      %s30 = sshll.u32 %s1, 4
      %s31 = int_to_ptr.hbm [resolvable:$true] %s30
      %s32 = sshll.u32 [#allocation5], 4
      %s33 = int_to_ptr.vmem [resolvable:$true] %s32
      %38 = dma.hbm_to_vmem [thread:$0]  %s31, 512, %s33, [#allocation6], 128, 128, 8
    $region9: #{tpu_custom_call.1} parent=1 // pred_fallthru
      _
    // Predicated region
    $region10: #{tpu_custom_call.1} parent=1 // pred_check
      _
    $region11: #{tpu_custom_call.1} parent=1 // pred_check_branch
      %40 = sbr.rel (0) target = $region13
    $region12: #{tpu_custom_call.1} parent=1 // pred_region
      %42 = vsyncadd [#allocation6], 0
      %s43 = sshll.u32 %s2, 4
      %s44 = int_to_ptr.hbm [resolvable:$true] %s43
      %s45 = sshll.u32 [#allocation7], 4
      %s46 = int_to_ptr.vmem [resolvable:$true] %s45
      %51 = dma.hbm_to_vmem [thread:$0]  %s44, 18432, %s46, [#allocation6], 128, 128, 8
    $region13: #{tpu_custom_call.1} parent=1 // pred_fallthru
      _
    // Predicated region
    $region14: #{tpu_custom_call.1} parent=1 // pred_check
      _
    $region15: #{tpu_custom_call.1} parent=1 // pred_check_branch
      %53 = sbr.rel (0) target = $region17
    $region16: #{tpu_custom_call.1} parent=1 // pred_region
      %55 = vsyncadd [#allocation9], 0
      %s57 = sshll.u32 %s3, 4
      %s58 = int_to_ptr.hbm [resolvable:$true] %s57
      %s59 = sshll.u32 [#allocation8], 4
      %s60 = int_to_ptr.vmem [resolvable:$true] %s59
      %62 = dma.hbm_to_vmem [thread:$0]  %s58, 128, %s60, [#allocation9]
    $region17: #{tpu_custom_call.1} parent=1 // pred_fallthru
      _
    // Predicated region
    $region18: #{tpu_custom_call.1} parent=1 // pred_check
      _
    $region19: #{tpu_custom_call.1} parent=1 // pred_check_branch
      %64 = sbr.rel (0) target = $region21
    $region20: #{tpu_custom_call.1} parent=1 // pred_region
      %66 = dma.done [#allocation3], 512
    $region21: #{tpu_custom_call.1} parent=1 // pred_fallthru
      _
    // Predicated region
    $region22: #{tpu_custom_call.1} parent=1 // pred_check
      _
    $region23: #{tpu_custom_call.1} parent=1 // pred_check_branch
      %68 = sbr.rel (0) target = $region25
    $region24: #{tpu_custom_call.1} parent=1 // pred_region
      %70 = dma.done [#allocation6], 512
    $region25: #{tpu_custom_call.1} parent=1 // pred_fallthru
      _
    // Predicated region
    $region26: #{tpu_custom_call.1} parent=1 // pred_check
      _
    $region27: #{tpu_custom_call.1} parent=1 // pred_check_branch
      %72 = sbr.rel (0) target = $region29
    $region28: #{tpu_custom_call.1} parent=1 // pred_region
      %74 = dma.done [#allocation6], 18432
    $region29: #{tpu_custom_call.1} parent=1 // pred_fallthru
      _
    // Predicated region
    $region30: #{tpu_custom_call.1} parent=1 // pred_check
      _
    $region31: #{tpu_custom_call.1} parent=1 // pred_check_branch
      %76 = sbr.rel (0) target = $region33
    $region32: #{tpu_custom_call.1} parent=1 // pred_region
      %78 = dma.done [#allocation9], 128
    $region33: #{tpu_custom_call.1} parent=1 // pred_fallthru
      _
    %v79 = vld [vmem:[#allocation2] sm:$0xff]
    %v80 = vld [vmem:[#allocation2 + $0x8] sm:$0xff]
    %v81 = vld [vmem:[#allocation2 + $0x10] sm:$0xff]
    %v82 = vld [vmem:[#allocation2 + $0x18] sm:$0xff]
    %v83 = vld [vmem:[#allocation5] sm:$0xff]
    %v84 = vld [vmem:[#allocation5 + $0x8] sm:$0xff]
    %v85 = vld [vmem:[#allocation5 + $0x10] sm:$0xff]
    %v86 = vld [vmem:[#allocation5 + $0x18] sm:$0xff]
    %vm87 = vcmask 261120
    %v89 = vsel %vm87, %v83, 0
    %v92 = vsel %vm87, %v84, 0
    %v95 = vsel %vm87, %v85, 0
    %v98 = vsel %vm87, %v86, 0
    %100 = vmatpush.msra.mxu0 0.0
    %101 = vmatpush.msra.mxu0 0.0
    %102 = vmatpush.msra.mxu0 0.0
    %103 = vmatpush.msra.mxu0 0.0
    %104 = vmatpush.msra.mxu0 0.0
    %105 = vmatpush.msra.mxu0 0.0
    %106 = vmatpush.msra.mxu0 0.0
    %107 = vmatpush.msra.mxu0 0.0
    %108 = vmatpush.msra.mxu0 0.0
    %109 = vmatpush.msra.mxu0 0.0
    %110 = vmatpush.msra.mxu0 0.0
    %111 = vmatpush.msra.mxu0 0.0
    %112 = vmatpush.msra.mxu0 %v82
    %113 = vmatpush.msra.mxu0 %v81
    %114 = vmatpush.msra.mxu0 %v80
    %115 = vmatpush.msra.mxu0 %v79
    %116 = vmatmul.f32.gmra.mxu0 %v89
    %v117 = vpop.f32.mrf.mxu0
    %v118 = vadd.f32 0.0, %v117
    %119 = vmatmul.f32.gmra.mxu0 %v92
    %v120 = vpop.f32.mrf.mxu0
    %v121 = vadd.f32 0.0, %v120
    %122 = vmatmul.f32.gmra.mxu0 %v95
    %v123 = vpop.f32.mrf.mxu0
    %v124 = vadd.f32 0.0, %v123
    %125 = vmatmul.f32.gmra.mxu0 %v98
    %v126 = vpop.f32.mrf.mxu0
    %v127 = vadd.f32 0.0, %v126
    %128 = vdwg.mxu0
    %v129 = vld [vmem:[#allocation7] sm:$0xff]
    %v130 = vld [vmem:[#allocation7 + $0x8] sm:$0xff]
    %v131 = vld [vmem:[#allocation7 + $0x10] sm:$0xff]
    %v132 = vld [vmem:[#allocation7 + $0x18] sm:$0xff]
    %v133 = vld [vmem:[#allocation7 + $0x20] sm:$0xff]
    %v134 = vld [vmem:[#allocation7 + $0x28] sm:$0xff]
    %v135 = vld [vmem:[#allocation7 + $0x30] sm:$0xff]
    %v136 = vld [vmem:[#allocation7 + $0x38] sm:$0xff]
    %v137 = vld [vmem:[#allocation7 + $0x40] sm:$0xff]
    %v138 = vld [vmem:[#allocation7 + $0x48] sm:$0xff]
    %v139 = vld [vmem:[#allocation7 + $0x50] sm:$0xff]
    %v140 = vld [vmem:[#allocation7 + $0x58] sm:$0xff]
    %v141 = vld [vmem:[#allocation7 + $0x60] sm:$0xff]
    %v142 = vld [vmem:[#allocation7 + $0x68] sm:$0xff]
    %v143 = vld [vmem:[#allocation7 + $0x70] sm:$0xff]
    %v144 = vld [vmem:[#allocation7 + $0x78] sm:$0xff]
    %v145 = vld [vmem:[#allocation7 + $0x80] sm:$0xff]
    %v146 = vld [vmem:[#allocation7 + $0x88] sm:$0xff]
    %v147 = vld [vmem:[#allocation7 + $0x90] sm:$0xff]
    %v148 = vld [vmem:[#allocation7 + $0x98] sm:$0xff]
    %v149 = vld [vmem:[#allocation7 + $0xa0] sm:$0xff]
    %v150 = vld [vmem:[#allocation7 + $0xa8] sm:$0xff]
    %v151 = vld [vmem:[#allocation7 + $0xb0] sm:$0xff]
    %v152 = vld [vmem:[#allocation7 + $0xb8] sm:$0xff]
    %v153 = vld [vmem:[#allocation7 + $0xc0] sm:$0xff]
    %v154 = vld [vmem:[#allocation7 + $0xc8] sm:$0xff]
    %v155 = vld [vmem:[#allocation7 + $0xd0] sm:$0xff]
    %v156 = vld [vmem:[#allocation7 + $0xd8] sm:$0xff]
    %v157 = vld [vmem:[#allocation7 + $0xe0] sm:$0xff]
    %v158 = vld [vmem:[#allocation7 + $0xe8] sm:$0xff]
    %v159 = vld [vmem:[#allocation7 + $0xf0] sm:$0xff]
    %v160 = vld [vmem:[#allocation7 + $0xf8] sm:$0xff]
    %v161 = vld [vmem:[#allocation8] sm:$0x1]
    %v162 = vperm.slane %v161, 0
    %163 = vmatpush.msra.mxu0 %v144
    %164 = vmatpush.msra.mxu0 %v143
    %165 = vmatpush.msra.mxu0 %v142
    %166 = vmatpush.msra.mxu0 %v141
    %167 = vmatpush.msra.mxu0 %v140
    %168 = vmatpush.msra.mxu0 %v139
    %169 = vmatpush.msra.mxu0 %v138
    %170 = vmatpush.msra.mxu0 %v137
    %171 = vmatpush.msra.mxu0 %v136
    %172 = vmatpush.msra.mxu0 %v135
    %173 = vmatpush.msra.mxu0 %v134
    %174 = vmatpush.msra.mxu0 %v133
    %175 = vmatpush.msra.mxu0 %v132
    %176 = vmatpush.msra.mxu0 %v131
    %177 = vmatpush.msra.mxu0 %v130
    %178 = vmatpush.msra.mxu0 %v129
    %179 = vmatmul.f32.gmra.mxu0 %v118
    %v180 = vpop.f32.mrf.mxu0
    %v181 = vadd.f32 %v162, %v180
    %182 = vmatmul.f32.gmra.mxu0 %v121
    %v183 = vpop.f32.mrf.mxu0
    %v184 = vadd.f32 %v162, %v183
    %185 = vmatmul.f32.gmra.mxu0 %v124
    %v186 = vpop.f32.mrf.mxu0
    %v187 = vadd.f32 %v162, %v186
    %188 = vmatmul.f32.gmra.mxu0 %v127
    %v189 = vpop.f32.mrf.mxu0
    %v190 = vadd.f32 %v162, %v189
    %191 = vdwg.mxu0
    %192 = vmatpush.msra.mxu0 %v160
    %193 = vmatpush.msra.mxu0 %v159
    %194 = vmatpush.msra.mxu0 %v158
    %195 = vmatpush.msra.mxu0 %v157
    %196 = vmatpush.msra.mxu0 %v156
    %197 = vmatpush.msra.mxu0 %v155
    %198 = vmatpush.msra.mxu0 %v154
    %199 = vmatpush.msra.mxu0 %v153
    %200 = vmatpush.msra.mxu0 %v152
    %201 = vmatpush.msra.mxu0 %v151
    %202 = vmatpush.msra.mxu0 %v150
    %203 = vmatpush.msra.mxu0 %v149
    %204 = vmatpush.msra.mxu0 %v148
    %205 = vmatpush.msra.mxu0 %v147
    %206 = vmatpush.msra.mxu0 %v146
    %207 = vmatpush.msra.mxu0 %v145
    %208 = vmatmul.f32.gmra.mxu0 %v79
    %v209 = vpop.f32.mrf.mxu0
    %v210 = vadd.f32 %v181, %v209
    %211 = vmatmul.f32.gmra.mxu0 %v80
    %v212 = vpop.f32.mrf.mxu0
    %v213 = vadd.f32 %v184, %v212
    %214 = vmatmul.f32.gmra.mxu0 %v81
    %v215 = vpop.f32.mrf.mxu0
    %v216 = vadd.f32 %v187, %v215
    %217 = vmatmul.f32.gmra.mxu0 %v82
    %v218 = vpop.f32.mrf.mxu0
    %v219 = vadd.f32 %v190, %v218
    %220 = vdwg.mxu0
    %v221 = vmul.f32 %v210, %v210
    %v222 = vmul.f32 %v213, %v213
    %v223 = vmul.f32 %v216, %v216
    %v224 = vmul.f32 %v219, %v219
    %225 = vadd.xlane.f32.xlu0 %v221
    %v226 = vpop.xlane.xlu0 %225
    %227 = vadd.xlane.f32.xlu0 %v222
    %v228 = vpop.xlane.xlu0 %227
    %229 = vadd.xlane.f32.xlu0 %v223
    %v230 = vpop.xlane.xlu0 %229
    %231 = vadd.xlane.f32.xlu0 %v224
    %v232 = vpop.xlane.xlu0 %231
    %v233 = vmax.f32 %v226, 1e-24
    %v234 = vmax.f32 %v228, 1e-24
    %v235 = vmax.f32 %v230, 1e-24
    %v236 = vmax.f32 %v232, 1e-24
    %v237 = vrsqrt.pop %v233
    %v238 = vmul.f32 %v237, %v233
    %v239 = vmul.f32 %v238, %v237
    %v240 = vmul.f32 0.5, %v239
    %v241 = vsub.f32 1.5, %v240
    %v242 = vmul.f32 %v237, %v241
    %vm243 = vweird.f32 %v233
    %vm244 = vweird.f32 %v237
    %vm245 = vmor %vm243, %vm244
    %v246 = vsel %vm245, %v237, %v242
    %v247 = vrsqrt.pop %v234
    %v248 = vmul.f32 %v247, %v234
    %v249 = vmul.f32 %v248, %v247
    %v250 = vmul.f32 0.5, %v249
    %v251 = vsub.f32 1.5, %v250
    %v252 = vmul.f32 %v247, %v251
    %vm253 = vweird.f32 %v234
    %vm254 = vweird.f32 %v247
    %vm255 = vmor %vm253, %vm254
    %v256 = vsel %vm255, %v247, %v252
    %v257 = vrsqrt.pop %v235
    %v258 = vmul.f32 %v257, %v235
    %v259 = vmul.f32 %v258, %v257
    %v260 = vmul.f32 0.5, %v259
    %v261 = vsub.f32 1.5, %v260
    %v262 = vmul.f32 %v257, %v261
    %vm263 = vweird.f32 %v235
    %vm264 = vweird.f32 %v257
    %vm265 = vmor %vm263, %vm264
    %v266 = vsel %vm265, %v257, %v262
    %v267 = vrsqrt.pop %v236
    %v268 = vmul.f32 %v267, %v236
    %v269 = vmul.f32 %v268, %v267
    %v270 = vmul.f32 0.5, %v269
    %v271 = vsub.f32 1.5, %v270
    %v272 = vmul.f32 %v267, %v271
    %vm273 = vweird.f32 %v236
    %vm274 = vweird.f32 %v267
    %vm275 = vmor %vm273, %vm274
    %v276 = vsel %vm275, %v267, %v272
    %v277 = vmul.f32 %v210, %v246
    %v278 = vmul.f32 %v213, %v256
    %v279 = vmul.f32 %v216, %v266
    %v280 = vmul.f32 %v219, %v276
    %v281 = vmax.f32 %v277, 0.0
    %v282 = vmax.f32 %v278, 0.0
    %v283 = vmax.f32 %v279, 0.0
    %v284 = vmax.f32 %v280, 0.0
    %285 = vmatpush.msra.mxu0 0.0
    %286 = vmatpush.msra.mxu0 0.0
    %287 = vmatpush.msra.mxu0 0.0
    %288 = vmatpush.msra.mxu0 0.0
    %289 = vmatpush.msra.mxu0 0.0
    %290 = vmatpush.msra.mxu0 0.0
    %291 = vmatpush.msra.mxu0 0.0
    %292 = vmatpush.msra.mxu0 0.0
    %293 = vmatpush.msra.mxu0 0.0
    %294 = vmatpush.msra.mxu0 0.0
    %295 = vmatpush.msra.mxu0 0.0
    %296 = vmatpush.msra.mxu0 0.0
    %297 = vmatpush.msra.mxu0 %v284
    %298 = vmatpush.msra.mxu0 %v283
    %299 = vmatpush.msra.mxu0 %v282
    %300 = vmatpush.msra.mxu0 %v281
    %301 = vmatmul.f32.gmra.mxu0 %v89
    %v302 = vpop.f32.mrf.mxu0
    %v303 = vadd.f32 0.0, %v302
    %304 = vmatmul.f32.gmra.mxu0 %v92
    %v305 = vpop.f32.mrf.mxu0
    %v306 = vadd.f32 0.0, %v305
    %307 = vmatmul.f32.gmra.mxu0 %v95
    %v308 = vpop.f32.mrf.mxu0
    %v309 = vadd.f32 0.0, %v308
    %310 = vmatmul.f32.gmra.mxu0 %v98
    %v311 = vpop.f32.mrf.mxu0
    %v312 = vadd.f32 0.0, %v311
    %313 = vdwg.mxu0
    %v314 = vld [vmem:[#allocation7 + $0x100] sm:$0xff]
    %v315 = vld [vmem:[#allocation7 + $0x108] sm:$0xff]
    %v316 = vld [vmem:[#allocation7 + $0x110] sm:$0xff]
    %v317 = vld [vmem:[#allocation7 + $0x118] sm:$0xff]
    %v318 = vld [vmem:[#allocation7 + $0x120] sm:$0xff]
    %v319 = vld [vmem:[#allocation7 + $0x128] sm:$0xff]
    %v320 = vld [vmem:[#allocation7 + $0x130] sm:$0xff]
    %v321 = vld [vmem:[#allocation7 + $0x138] sm:$0xff]
    %v322 = vld [vmem:[#allocation7 + $0x140] sm:$0xff]
    %v323 = vld [vmem:[#allocation7 + $0x148] sm:$0xff]
    %v324 = vld [vmem:[#allocation7 + $0x150] sm:$0xff]
    %v325 = vld [vmem:[#allocation7 + $0x158] sm:$0xff]
    %v326 = vld [vmem:[#allocation7 + $0x160] sm:$0xff]
    %v327 = vld [vmem:[#allocation7 + $0x168] sm:$0xff]
    %v328 = vld [vmem:[#allocation7 + $0x170] sm:$0xff]
    %v329 = vld [vmem:[#allocation7 + $0x178] sm:$0xff]
    %v330 = vld [vmem:[#allocation7 + $0x180] sm:$0xff]
    %v331 = vld [vmem:[#allocation7 + $0x188] sm:$0xff]
    %v332 = vld [vmem:[#allocation7 + $0x190] sm:$0xff]
    %v333 = vld [vmem:[#allocation7 + $0x198] sm:$0xff]
    %v334 = vld [vmem:[#allocation7 + $0x1a0] sm:$0xff]
    %v335 = vld [vmem:[#allocation7 + $0x1a8] sm:$0xff]
    %v336 = vld [vmem:[#allocation7 + $0x1b0] sm:$0xff]
    %v337 = vld [vmem:[#allocation7 + $0x1b8] sm:$0xff]
    %v338 = vld [vmem:[#allocation7 + $0x1c0] sm:$0xff]
    %v339 = vld [vmem:[#allocation7 + $0x1c8] sm:$0xff]
    %v340 = vld [vmem:[#allocation7 + $0x1d0] sm:$0xff]
    %v341 = vld [vmem:[#allocation7 + $0x1d8] sm:$0xff]
    %v342 = vld [vmem:[#allocation7 + $0x1e0] sm:$0xff]
    %v343 = vld [vmem:[#allocation7 + $0x1e8] sm:$0xff]
    %v344 = vld [vmem:[#allocation7 + $0x1f0] sm:$0xff]
    %v345 = vld [vmem:[#allocation7 + $0x1f8] sm:$0xff]
    %v346 = vld [vmem:[#allocation8 + $0x1] sm:$0x1]
    %v347 = vperm.slane %v346, 0
    %348 = vmatpush.msra.mxu0 %v329
    %349 = vmatpush.msra.mxu0 %v328
    %350 = vmatpush.msra.mxu0 %v327
    %351 = vmatpush.msra.mxu0 %v326
    %352 = vmatpush.msra.mxu0 %v325
    %353 = vmatpush.msra.mxu0 %v324
    %354 = vmatpush.msra.mxu0 %v323
    %355 = vmatpush.msra.mxu0 %v322
    %356 = vmatpush.msra.mxu0 %v321
    %357 = vmatpush.msra.mxu0 %v320
    %358 = vmatpush.msra.mxu0 %v319
    %359 = vmatpush.msra.mxu0 %v318
    %360 = vmatpush.msra.mxu0 %v317
    %361 = vmatpush.msra.mxu0 %v316
    %362 = vmatpush.msra.mxu0 %v315
    %363 = vmatpush.msra.mxu0 %v314
    %364 = vmatmul.f32.gmra.mxu0 %v303
    %v365 = vpop.f32.mrf.mxu0
    %v366 = vadd.f32 %v347, %v365
    %367 = vmatmul.f32.gmra.mxu0 %v306
    %v368 = vpop.f32.mrf.mxu0
    %v369 = vadd.f32 %v347, %v368
    %370 = vmatmul.f32.gmra.mxu0 %v309
    %v371 = vpop.f32.mrf.mxu0
    %v372 = vadd.f32 %v347, %v371
    %373 = vmatmul.f32.gmra.mxu0 %v312
    %v374 = vpop.f32.mrf.mxu0
    %v375 = vadd.f32 %v347, %v374
    %376 = vdwg.mxu0
    %377 = vmatpush.msra.mxu0 %v345
    %378 = vmatpush.msra.mxu0 %v344
    %379 = vmatpush.msra.mxu0 %v343
    %380 = vmatpush.msra.mxu0 %v342
    %381 = vmatpush.msra.mxu0 %v341
    %382 = vmatpush.msra.mxu0 %v340
    %383 = vmatpush.msra.mxu0 %v339
    %384 = vmatpush.msra.mxu0 %v338
    %385 = vmatpush.msra.mxu0 %v337
    %386 = vmatpush.msra.mxu0 %v336
    %387 = vmatpush.msra.mxu0 %v335
    %388 = vmatpush.msra.mxu0 %v334
    %389 = vmatpush.msra.mxu0 %v333
    %390 = vmatpush.msra.mxu0 %v332
    %391 = vmatpush.msra.mxu0 %v331
    %392 = vmatpush.msra.mxu0 %v330
    %393 = vmatmul.f32.gmra.mxu0 %v281
    %v394 = vpop.f32.mrf.mxu0
    %v395 = vadd.f32 %v366, %v394
    %396 = vmatmul.f32.gmra.mxu0 %v282
    %v397 = vpop.f32.mrf.mxu0
    %v398 = vadd.f32 %v369, %v397
    %399 = vmatmul.f32.gmra.mxu0 %v283
    %v400 = vpop.f32.mrf.mxu0
    %v401 = vadd.f32 %v372, %v400
    %402 = vmatmul.f32.gmra.mxu0 %v284
    %v403 = vpop.f32.mrf.mxu0
    %v404 = vadd.f32 %v375, %v403
    %405 = vdwg.mxu0
    %v406 = vmax.f32 %v395, 0.0
    %v407 = vmax.f32 %v398, 0.0
    %v408 = vmax.f32 %v401, 0.0
    %v409 = vmax.f32 %v404, 0.0
    %410 = vmatpush.msra.mxu0 0.0
    %411 = vmatpush.msra.mxu0 0.0
    %412 = vmatpush.msra.mxu0 0.0
    %413 = vmatpush.msra.mxu0 0.0
    %414 = vmatpush.msra.mxu0 0.0
    %415 = vmatpush.msra.mxu0 0.0
    %416 = vmatpush.msra.mxu0 0.0
    %417 = vmatpush.msra.mxu0 0.0
    %418 = vmatpush.msra.mxu0 0.0
    %419 = vmatpush.msra.mxu0 0.0
    %420 = vmatpush.msra.mxu0 0.0
    %421 = vmatpush.msra.mxu0 0.0
    %422 = vmatpush.msra.mxu0 %v409
    %423 = vmatpush.msra.mxu0 %v408
    %424 = vmatpush.msra.mxu0 %v407
    %425 = vmatpush.msra.mxu0 %v406
    %426 = vmatmul.f32.gmra.mxu0 %v89
    %v427 = vpop.f32.mrf.mxu0
    %v428 = vadd.f32 0.0, %v427
    %429 = vmatmul.f32.gmra.mxu0 %v92
    %v430 = vpop.f32.mrf.mxu0
    %v431 = vadd.f32 0.0, %v430
    %432 = vmatmul.f32.gmra.mxu0 %v95
    %v433 = vpop.f32.mrf.mxu0
    %v434 = vadd.f32 0.0, %v433
    %435 = vmatmul.f32.gmra.mxu0 %v98
    %v436 = vpop.f32.mrf.mxu0
    %v437 = vadd.f32 0.0, %v436
    %438 = vdwg.mxu0
    %v439 = vld [vmem:[#allocation7 + $0x200] sm:$0xff]
    %v440 = vld [vmem:[#allocation7 + $0x208] sm:$0xff]
    %v441 = vld [vmem:[#allocation7 + $0x210] sm:$0xff]
    %v442 = vld [vmem:[#allocation7 + $0x218] sm:$0xff]
    %v443 = vld [vmem:[#allocation7 + $0x220] sm:$0xff]
    %v444 = vld [vmem:[#allocation7 + $0x228] sm:$0xff]
    %v445 = vld [vmem:[#allocation7 + $0x230] sm:$0xff]
    %v446 = vld [vmem:[#allocation7 + $0x238] sm:$0xff]
    %v447 = vld [vmem:[#allocation7 + $0x240] sm:$0xff]
    %v448 = vld [vmem:[#allocation7 + $0x248] sm:$0xff]
    %v449 = vld [vmem:[#allocation7 + $0x250] sm:$0xff]
    %v450 = vld [vmem:[#allocation7 + $0x258] sm:$0xff]
    %v451 = vld [vmem:[#allocation7 + $0x260] sm:$0xff]
    %v452 = vld [vmem:[#allocation7 + $0x268] sm:$0xff]
    %v453 = vld [vmem:[#allocation7 + $0x270] sm:$0xff]
    %v454 = vld [vmem:[#allocation7 + $0x278] sm:$0xff]
    %v455 = vld [vmem:[#allocation7 + $0x280] sm:$0xff]
    %v456 = vld [vmem:[#allocation7 + $0x288] sm:$0xff]
    %v457 = vld [vmem:[#allocation7 + $0x290] sm:$0xff]
    %v458 = vld [vmem:[#allocation7 + $0x298] sm:$0xff]
    %v459 = vld [vmem:[#allocation7 + $0x2a0] sm:$0xff]
    %v460 = vld [vmem:[#allocation7 + $0x2a8] sm:$0xff]
    %v461 = vld [vmem:[#allocation7 + $0x2b0] sm:$0xff]
    %v462 = vld [vmem:[#allocation7 + $0x2b8] sm:$0xff]
    %v463 = vld [vmem:[#allocation7 + $0x2c0] sm:$0xff]
    %v464 = vld [vmem:[#allocation7 + $0x2c8] sm:$0xff]
    %v465 = vld [vmem:[#allocation7 + $0x2d0] sm:$0xff]
    %v466 = vld [vmem:[#allocation7 + $0x2d8] sm:$0xff]
    %v467 = vld [vmem:[#allocation7 + $0x2e0] sm:$0xff]
    %v468 = vld [vmem:[#allocation7 + $0x2e8] sm:$0xff]
    %v469 = vld [vmem:[#allocation7 + $0x2f0] sm:$0xff]
    %v470 = vld [vmem:[#allocation7 + $0x2f8] sm:$0xff]
    %v471 = vld [vmem:[#allocation8 + $0x2] sm:$0x1]
    %v472 = vperm.slane %v471, 0
    %473 = vmatpush.msra.mxu0 %v454
    %474 = vmatpush.msra.mxu0 %v453
    %475 = vmatpush.msra.mxu0 %v452
    %476 = vmatpush.msra.mxu0 %v451
    %477 = vmatpush.msra.mxu0 %v450
    %478 = vmatpush.msra.mxu0 %v449
    %479 = vmatpush.msra.mxu0 %v448
    %480 = vmatpush.msra.mxu0 %v447
    %481 = vmatpush.msra.mxu0 %v446
    %482 = vmatpush.msra.mxu0 %v445
    %483 = vmatpush.msra.mxu0 %v444
    %484 = vmatpush.msra.mxu0 %v443
    %485 = vmatpush.msra.mxu0 %v442
    %486 = vmatpush.msra.mxu0 %v441
    %487 = vmatpush.msra.mxu0 %v440
    %488 = vmatpush.msra.mxu0 %v439
    %489 = vmatmul.f32.gmra.mxu0 %v428
    %v490 = vpop.f32.mrf.mxu0
    %v491 = vadd.f32 %v472, %v490
    %492 = vmatmul.f32.gmra.mxu0 %v431
    %v493 = vpop.f32.mrf.mxu0
    %v494 = vadd.f32 %v472, %v493
    %495 = vmatmul.f32.gmra.mxu0 %v434
    %v496 = vpop.f32.mrf.mxu0
    %v497 = vadd.f32 %v472, %v496
    %498 = vmatmul.f32.gmra.mxu0 %v437
    %v499 = vpop.f32.mrf.mxu0
    %v500 = vadd.f32 %v472, %v499
    %501 = vdwg.mxu0
    %502 = vmatpush.msra.mxu0 %v470
    %503 = vmatpush.msra.mxu0 %v469
    %504 = vmatpush.msra.mxu0 %v468
    %505 = vmatpush.msra.mxu0 %v467
    %506 = vmatpush.msra.mxu0 %v466
    %507 = vmatpush.msra.mxu0 %v465
    %508 = vmatpush.msra.mxu0 %v464
    %509 = vmatpush.msra.mxu0 %v463
    %510 = vmatpush.msra.mxu0 %v462
    %511 = vmatpush.msra.mxu0 %v461
    %512 = vmatpush.msra.mxu0 %v460
    %513 = vmatpush.msra.mxu0 %v459
    %514 = vmatpush.msra.mxu0 %v458
    %515 = vmatpush.msra.mxu0 %v457
    %516 = vmatpush.msra.mxu0 %v456
    %517 = vmatpush.msra.mxu0 %v455
    %518 = vmatmul.f32.gmra.mxu0 %v406
    %v519 = vpop.f32.mrf.mxu0
    %v520 = vadd.f32 %v491, %v519
    %521 = vmatmul.f32.gmra.mxu0 %v407
    %v522 = vpop.f32.mrf.mxu0
    %v523 = vadd.f32 %v494, %v522
    %524 = vmatmul.f32.gmra.mxu0 %v408
    %v525 = vpop.f32.mrf.mxu0
    %v526 = vadd.f32 %v497, %v525
    %527 = vmatmul.f32.gmra.mxu0 %v409
    %v528 = vpop.f32.mrf.mxu0
    %v529 = vadd.f32 %v500, %v528
    %530 = vdwg.mxu0
    %v531 = vld [vmem:[#allocation7 + $0x300] sm:$0xff]
    %v532 = vld [vmem:[#allocation7 + $0x308] sm:$0xff]
    %v533 = vld [vmem:[#allocation7 + $0x310] sm:$0xff]
    %v534 = vld [vmem:[#allocation7 + $0x318] sm:$0xff]
    %v535 = vld [vmem:[#allocation7 + $0x320] sm:$0xff]
    %v536 = vld [vmem:[#allocation7 + $0x328] sm:$0xff]
    %v537 = vld [vmem:[#allocation7 + $0x330] sm:$0xff]
    %v538 = vld [vmem:[#allocation7 + $0x338] sm:$0xff]
    %v539 = vld [vmem:[#allocation7 + $0x340] sm:$0xff]
    %v540 = vld [vmem:[#allocation7 + $0x348] sm:$0xff]
    %v541 = vld [vmem:[#allocation7 + $0x350] sm:$0xff]
    %v542 = vld [vmem:[#allocation7 + $0x358] sm:$0xff]
    %v543 = vld [vmem:[#allocation7 + $0x360] sm:$0xff]
    %v544 = vld [vmem:[#allocation7 + $0x368] sm:$0xff]
    %v545 = vld [vmem:[#allocation7 + $0x370] sm:$0xff]
    %v546 = vld [vmem:[#allocation7 + $0x378] sm:$0xff]
    %v547 = vld [vmem:[#allocation8 + $0x3] sm:$0x1]
    %v548 = vperm.slane %v547, 0
    %549 = vmatpush.msra.mxu0 %v546
    %550 = vmatpush.msra.mxu0 %v545
    %551 = vmatpush.msra.mxu0 %v544
    %552 = vmatpush.msra.mxu0 %v543
    %553 = vmatpush.msra.mxu0 %v542
    %554 = vmatpush.msra.mxu0 %v541
    %555 = vmatpush.msra.mxu0 %v540
    %556 = vmatpush.msra.mxu0 %v539
    %557 = vmatpush.msra.mxu0 %v538
    %558 = vmatpush.msra.mxu0 %v537
    %559 = vmatpush.msra.mxu0 %v536
    %560 = vmatpush.msra.mxu0 %v535
    %561 = vmatpush.msra.mxu0 %v534
    %562 = vmatpush.msra.mxu0 %v533
    %563 = vmatpush.msra.mxu0 %v532
    %564 = vmatpush.msra.mxu0 %v531
    %565 = vmatmul.f32.gmra.mxu0 %v520
    %v566 = vpop.f32.mrf.mxu0
    %v567 = vadd.f32 %v548, %v566
    %568 = vmatmul.f32.gmra.mxu0 %v523
    %v569 = vpop.f32.mrf.mxu0
    %v570 = vadd.f32 %v548, %v569
    %571 = vmatmul.f32.gmra.mxu0 %v526
    %v572 = vpop.f32.mrf.mxu0
    %v573 = vadd.f32 %v548, %v572
    %574 = vmatmul.f32.gmra.mxu0 %v529
    %v575 = vpop.f32.mrf.mxu0
    %v576 = vadd.f32 %v548, %v575
    %577 = vdwg.mxu0
    %v578 = vmax.f32 %v567, 0.0
    %v579 = vmax.f32 %v570, 0.0
    %v580 = vmax.f32 %v573, 0.0
    %v581 = vmax.f32 %v576, 0.0
    %v582 = vld [vmem:[#allocation7 + $0x380] sm:$0xff]
    %v583 = vld [vmem:[#allocation7 + $0x388] sm:$0xff]
    %v584 = vld [vmem:[#allocation7 + $0x390] sm:$0xff]
    %v585 = vld [vmem:[#allocation7 + $0x398] sm:$0xff]
    %v586 = vld [vmem:[#allocation7 + $0x3a0] sm:$0xff]
    %v587 = vld [vmem:[#allocation7 + $0x3a8] sm:$0xff]
    %v588 = vld [vmem:[#allocation7 + $0x3b0] sm:$0xff]
    %v589 = vld [vmem:[#allocation7 + $0x3b8] sm:$0xff]
    %v590 = vld [vmem:[#allocation7 + $0x3c0] sm:$0xff]
    %v591 = vld [vmem:[#allocation7 + $0x3c8] sm:$0xff]
    %v592 = vld [vmem:[#allocation7 + $0x3d0] sm:$0xff]
    %v593 = vld [vmem:[#allocation7 + $0x3d8] sm:$0xff]
    %v594 = vld [vmem:[#allocation7 + $0x3e0] sm:$0xff]
    %v595 = vld [vmem:[#allocation7 + $0x3e8] sm:$0xff]
    %v596 = vld [vmem:[#allocation7 + $0x3f0] sm:$0xff]
    %v597 = vld [vmem:[#allocation7 + $0x3f8] sm:$0xff]
    %v598 = vld [vmem:[#allocation8 + $0x4] sm:$0x1]
    %v599 = vperm.slane %v598, 0
    %600 = vmatpush.msra.mxu0 %v597
    %601 = vmatpush.msra.mxu0 %v596
    %602 = vmatpush.msra.mxu0 %v595
    %603 = vmatpush.msra.mxu0 %v594
    %604 = vmatpush.msra.mxu0 %v593
    %605 = vmatpush.msra.mxu0 %v592
    %606 = vmatpush.msra.mxu0 %v591
    %607 = vmatpush.msra.mxu0 %v590
    %608 = vmatpush.msra.mxu0 %v589
    %609 = vmatpush.msra.mxu0 %v588
    %610 = vmatpush.msra.mxu0 %v587
    %611 = vmatpush.msra.mxu0 %v586
    %612 = vmatpush.msra.mxu0 %v585
    %613 = vmatpush.msra.mxu0 %v584
    %614 = vmatpush.msra.mxu0 %v583
    %615 = vmatpush.msra.mxu0 %v582
    %616 = vmatmul.f32.gmra.mxu0 %v578
    %v617 = vpop.f32.mrf.mxu0
    %v618 = vadd.f32 %v599, %v617
    %619 = vmatmul.f32.gmra.mxu0 %v579
    %v620 = vpop.f32.mrf.mxu0
    %v621 = vadd.f32 %v599, %v620
    %622 = vmatmul.f32.gmra.mxu0 %v580
    %v623 = vpop.f32.mrf.mxu0
    %v624 = vadd.f32 %v599, %v623
    %625 = vmatmul.f32.gmra.mxu0 %v581
    %v626 = vpop.f32.mrf.mxu0
    %v627 = vadd.f32 %v599, %v626
    %628 = vdwg.mxu0
    %v629 = vmax.f32 %v618, 0.0
    %v630 = vmax.f32 %v621, 0.0
    %v631 = vmax.f32 %v624, 0.0
    %v632 = vmax.f32 %v627, 0.0
    %v633 = vld [vmem:[#allocation7 + $0x400] sm:$0xff]
    %v634 = vld [vmem:[#allocation7 + $0x408] sm:$0xff]
    %v635 = vld [vmem:[#allocation7 + $0x410] sm:$0xff]
    %v636 = vld [vmem:[#allocation7 + $0x418] sm:$0xff]
    %v637 = vld [vmem:[#allocation7 + $0x420] sm:$0xff]
    %v638 = vld [vmem:[#allocation7 + $0x428] sm:$0xff]
    %v639 = vld [vmem:[#allocation7 + $0x430] sm:$0xff]
    %v640 = vld [vmem:[#allocation7 + $0x438] sm:$0xff]
    %v641 = vld [vmem:[#allocation7 + $0x440] sm:$0xff]
    %v642 = vld [vmem:[#allocation7 + $0x448] sm:$0xff]
    %v643 = vld [vmem:[#allocation7 + $0x450] sm:$0xff]
    %v644 = vld [vmem:[#allocation7 + $0x458] sm:$0xff]
    %v645 = vld [vmem:[#allocation7 + $0x460] sm:$0xff]
    %v646 = vld [vmem:[#allocation7 + $0x468] sm:$0xff]
    %v647 = vld [vmem:[#allocation7 + $0x470] sm:$0xff]
    %v648 = vld [vmem:[#allocation7 + $0x478] sm:$0xff]
    %v649 = vld [vmem:[#allocation8 + $0x5] sm:$0x1]
    %v650 = vperm.slane %v649, 0
    %651 = vmatpush.msra.mxu0 %v648
    %652 = vmatpush.msra.mxu0 %v647
    %653 = vmatpush.msra.mxu0 %v646
    %654 = vmatpush.msra.mxu0 %v645
    %655 = vmatpush.msra.mxu0 %v644
    %656 = vmatpush.msra.mxu0 %v643
    %657 = vmatpush.msra.mxu0 %v642
    %658 = vmatpush.msra.mxu0 %v641
    %659 = vmatpush.msra.mxu0 %v640
    %660 = vmatpush.msra.mxu0 %v639
    %661 = vmatpush.msra.mxu0 %v638
    %662 = vmatpush.msra.mxu0 %v637
    %663 = vmatpush.msra.mxu0 %v636
    %664 = vmatpush.msra.mxu0 %v635
    %665 = vmatpush.msra.mxu0 %v634
    %666 = vmatpush.msra.mxu0 %v633
    %667 = vmatmul.f32.gmra.mxu0 %v629
    %v668 = vpop.f32.mrf.mxu0
    %v669 = vadd.f32 %v650, %v668
    %670 = vmatmul.f32.gmra.mxu0 %v630
    %v671 = vpop.f32.mrf.mxu0
    %v672 = vadd.f32 %v650, %v671
    %673 = vmatmul.f32.gmra.mxu0 %v631
    %v674 = vpop.f32.mrf.mxu0
    %v675 = vadd.f32 %v650, %v674
    %676 = vmatmul.f32.gmra.mxu0 %v632
    %v677 = vpop.f32.mrf.mxu0
    %v678 = vadd.f32 %v650, %v677
    %679 = vdwg.mxu0
    %680 = vmax.xlane.f32.xlu0 %v669
    %v681 = vpop.xlane.xlu0 %680
    %682 = vmax.xlane.f32.xlu0 %v672
    %v683 = vpop.xlane.xlu0 %682
    %684 = vmax.xlane.f32.xlu0 %v675
    %v685 = vpop.xlane.xlu0 %684
    %686 = vmax.xlane.f32.xlu0 %v678
    %v687 = vpop.xlane.xlu0 %686
    %v688 = vsub.f32 %v669, %v681
    %v689 = vsub.f32 %v672, %v683
    %v690 = vsub.f32 %v675, %v685
    %v691 = vsub.f32 %v678, %v687
    %v692 = vmul.f32 %v688, 1.442695
    %v693 = vpow.pop %v692
    %v694 = vmul.f32 %v689, 1.442695
    %v695 = vpow.pop %v694
    %v696 = vmul.f32 %v690, 1.442695
    %v697 = vpow.pop %v696
    %v698 = vmul.f32 %v691, 1.442695
    %v699 = vpow.pop %v698
    %700 = vadd.xlane.f32.xlu0 %v693
    %v701 = vpop.xlane.xlu0 %700
    %702 = vadd.xlane.f32.xlu0 %v695
    %v703 = vpop.xlane.xlu0 %702
    %704 = vadd.xlane.f32.xlu0 %v697
    %v705 = vpop.xlane.xlu0 %704
    %706 = vadd.xlane.f32.xlu0 %v699
    %v707 = vpop.xlane.xlu0 %706
    %v708 = vlog2.pop %v701
    %v709 = vmul.f32 %v708, 0.6931472
    %v710 = vlog2.pop %v703
    %v711 = vmul.f32 %v710, 0.6931472
    %v712 = vlog2.pop %v705
    %v713 = vmul.f32 %v712, 0.6931472
    %v714 = vlog2.pop %v707
    %v715 = vmul.f32 %v714, 0.6931472
    %v716 = vadd.f32 %v709, %v681
    %v717 = vadd.f32 %v711, %v683
    %v718 = vadd.f32 %v713, %v685
    %v719 = vadd.f32 %v715, %v687
    %v720 = vsub.f32 %v669, %v716
    %v721 = vsub.f32 %v672, %v717
    %v722 = vsub.f32 %v675, %v718
    %v723 = vsub.f32 %v678, %v719
    %724 = vst [vmem:[#allocation10] sm:$0xff] %v720
    %725 = vst [vmem:[#allocation10 + $0x8] sm:$0xff] %v721
    %726 = vst [vmem:[#allocation10 + $0x10] sm:$0xff] %v722
    %727 = vst [vmem:[#allocation10 + $0x18] sm:$0xff] %v723
    // Predicated region
    $region34: #{tpu_custom_call.1} parent=1 // pred_check
      _
    $region35: #{tpu_custom_call.1} parent=1 // pred_check_branch
      %729 = sbr.rel (0) target = $region37
    $region36: #{tpu_custom_call.1} parent=1 // pred_region
      %731 = vsyncadd [#allocation4], 0
      %s732 = sshll.u32 [#allocation10], 4
      %s733 = int_to_ptr.vmem [resolvable:$true] %s732
      %s734 = sshll.u32 %s4, 4
      %s735 = int_to_ptr.hbm [resolvable:$true] %s734
      %740 = dma.vmem_to_hbm [thread:$0]  %s733, 512, %s735, [#allocation4], 128, 128, 8
    $region37: #{tpu_custom_call.1} parent=1 // pred_fallthru
      _
    // Predicated region
    $region38: #{tpu_custom_call.1} parent=1 // pred_check
      _
    $region39: #{tpu_custom_call.1} parent=1 // pred_check_branch
      %742 = sbr.rel (0) target = $region41
    $region40: #{tpu_custom_call.1} parent=1 // pred_region
      %744 = dma.done [#allocation4], 512
    $region41: #{tpu_custom_call.1} parent=1 // pred_fallthru
      _
    %745 = vsyncpa [#allocation3], 1
    %746 = vsyncpa [#allocation6], 1
    %747 = vsyncpa [#allocation9], 1
    %748 = vsyncpa [#allocation4], 1

</llo_original>
